<compile_context>
chip_gen: v7x
topology: tpu7x:2x2x1
jax: 0.10.0
libtpu: 0.0.40
codegen_flags: <defaults>
</compile_context>

<pallas_src>
import functools

import jax
import jax.numpy as jnp
from jax import lax
from jax.experimental import pallas as pl
from jax.experimental.pallas import tpu as pltpu


def _round_up(n, m):
    return ((n + m - 1) // m) * m


def _min_sublane(dtype):
    # f32 -> 8, bf16/f16 -> 16, int8/fp8 -> 32 (sub-32-bit dtypes pack along sublanes).
    return max(8, 32 // jnp.dtype(dtype).itemsize)


def _vmem_limit_bytes():
    # Generation-aware limit: v5e/v6e have 128 MiB physical VMEM, v7x only 64 MiB.
    try:
        cap = int(pltpu.get_tpu_info().vmem_capacity_bytes)
    except Exception:  # conservative fallback (v7x-sized)
        cap = 64 * 1024 * 1024
    return int(min(cap * 3 // 4, 100 * 1024 * 1024))


def _fused_head_kernel(x_ref, w_ref, b_ref, o_ref):
    """One batch tile of the fused (mean || log-variance) linear head.

    x_ref: (TB, D)       activation tile (software-pipelined over the batch grid)
    w_ref: (O_rows, D)   fused [W_mu; W_lv] in native nn.Linear layout (resident)
    b_ref: (O_rows, 1)   fused [b_mu; b_lv] bias column, f32 (resident)
    o_ref: (O_rows, TB)  batch-on-lanes output tile (lane-dense stores)
    """
    acc = lax.dot_general(
        w_ref[...],
        x_ref[...],
        # contract W's D axis against x's D axis -> (O_rows, TB); weight needs no
        # transpose (it is the natural (M, K) LHS), x is consumed transposed.
        dimension_numbers=(((1,), (1,)), ((), ())),
        preferred_element_type=jnp.float32,
    )
    o_ref[...] = (acc + b_ref[...]).astype(o_ref.dtype)


def prepare_uncertainty_head_params(w_mu, b_mu, w_lv, b_lv, out_dtype=jnp.float32):
    """One-time parameter prep (hoist out of the per-forward path).

    w_*: (O, D) nn.Linear weight layout;  b_*: (O,).
    Returns (w_cat (O_rows, D), b_cat (O_rows, 1) f32), with O_rows = 2*O padded
    to the output dtype's min sublane count.
    """
    o_dim = w_mu.shape[0]
    o_fused = 2 * o_dim
    o_rows = _round_up(o_fused, _min_sublane(out_dtype))
    w_cat = jnp.concatenate([w_mu, w_lv], axis=0)
    w_cat = jnp.pad(w_cat, ((0, o_rows - o_fused), (0, 0)))
    b_cat = jnp.concatenate([b_mu, b_lv], axis=0).astype(jnp.float32)
    b_cat = jnp.pad(b_cat, (0, o_rows - o_fused)).reshape(o_rows, 1)
    return w_cat, b_cat


def uncertainty_head_apply(x, w_cat, b_cat, output_dim, *, max_block_rows=8192):
    """Fused forward. x: (B, D). Returns (mu, log_sigma_sq), each (B, output_dim)."""
    B, D = x.shape
    o_rows = w_cat.shape[0]
    out_dtype = x.dtype
    itemsize_x = jnp.dtype(x.dtype).itemsize
    itemsize_o = jnp.dtype(out_dtype).itemsize

    # ---- batch-tile sizing against the per-generation VMEM budget ----
    vmem_limit = _vmem_limit_bytes()
    budget = vmem_limit // 2  # headroom for resident weights/bias + pipeline bookkeeping
    # per batch row: double-buffered x tile + double-buffered output tile
    bytes_per_row = 2 * (D * itemsize_x + o_rows * itemsize_o)
    tb = budget // max(bytes_per_row, 1)
    tb = min(tb, max_block_rows)
    # batch rows sit on the output LANE axis -> multiple of 128 (also satisfies every
    # dtype's sublane minimum for the (TB, D) input block).
    tb = max(128, (tb // 128) * 128)
    if B >= 256:
        # keep >= 2 grid steps so ("parallel",) can shard tiles across v7x's 2 TCs
        tb = min(tb, _round_up(-(-B // 2), 128))
    tb = min(tb, _round_up(B, 128))
    b_pad = _round_up(B, tb)

    x_in = jnp.pad(x, ((0, b_pad - B), (0, 0))) if b_pad != B else x
    grid = (b_pad // tb,)

    fused = pl.pallas_call(
        _fused_head_kernel,
        out_shape=jax.ShapeDtypeStruct((o_rows, b_pad), out_dtype),
        grid_spec=pltpu.PrefetchScalarGridSpec(
            num_scalar_prefetch=0,
            grid=grid,
            in_specs=[
                pl.BlockSpec((tb, D), lambda i: (i, 0)),       # x: pipelined batch tiles
                pl.BlockSpec((o_rows, D), lambda i: (0, 0)),   # fused weights: resident
                pl.BlockSpec((o_rows, 1), lambda i: (0, 0)),   # fused bias:    resident
            ],
            out_specs=pl.BlockSpec((o_rows, tb), lambda i: (0, i)),
        ),
        compiler_params=pltpu.CompilerParams(
            dimension_semantics=("parallel",),   # shard batch tiles across TensorCores
            vmem_limit_bytes=vmem_limit,
        ),
        cost_estimate=pl.CostEstimate(
            flops=2 * b_pad * D * o_rows,
            transcendentals=0,
            bytes_accessed=(x_in.size * itemsize_x
                            + w_cat.size * jnp.dtype(w_cat.dtype).itemsize
                            + b_cat.size * 4
                            + o_rows * b_pad * itemsize_o),
        ),
    )(x_in, w_cat, b_cat)

    # Tiny (O, B) slices + transposes back to the module's (B, O) outputs.
    mu_pred = fused[:output_dim, :B].T
    log_sigma_sq_pred = fused[output_dim:2 * output_dim, :B].T
    return mu_pred, log_sigma_sq_pred


def uncertainty_regression_head(x, w_mu, b_mu, w_lv, b_lv, **kwargs):
    """Convenience one-shot API (in real use, prepare params once and reuse)."""
    w_cat, b_cat = prepare_uncertainty_head_params(w_mu, b_mu, w_lv, b_lv, out_dtype=x.dtype)
    return uncertainty_head_apply(x, w_cat, b_cat, w_mu.shape[0], **kwargs)


if __name__ == "__main__":
    # Small shapes consistent with the module: batch=8, input_dim=32, output_dim=2
    B, D, O = 8, 32, 2

    key = jax.random.PRNGKey(0)
    kx, kwm, kbm, kwv, kbv = jax.random.split(key, 5)

    x = jax.random.normal(kx, (B, D), dtype=jnp.float32)
    # nn.Linear parameter shapes: weight (out, in), bias (out,)
    w_mu = jax.random.normal(kwm, (O, D), dtype=jnp.float32) * 0.1
    b_mu = jax.random.normal(kbm, (O,), dtype=jnp.float32) * 0.1
    w_lv = jax.random.normal(kwv, (O, D), dtype=jnp.float32) * 0.1
    b_lv = jax.random.normal(kbv, (O,), dtype=jnp.float32) * 0.1

    # One-time parameter prep (hoisted out of the per-call path), then a jitted apply.
    w_cat, b_cat = prepare_uncertainty_head_params(w_mu, b_mu, w_lv, b_lv, out_dtype=x.dtype)
    head = jax.jit(functools.partial(uncertainty_head_apply, output_dim=O))

    mu_pred, log_sigma_sq_pred = head(x, w_cat, b_cat)
    jax.block_until_ready((mu_pred, log_sigma_sq_pred))

    # Correctness check against pure-JAX reference
    mu_ref = x @ w_mu.T + b_mu
    lv_ref = x @ w_lv.T + b_lv
    assert mu_pred.shape == (B, O) and log_sigma_sq_pred.shape == (B, O)
    assert jnp.allclose(mu_pred, mu_ref, atol=1e-5), "mu mismatch"
    assert jnp.allclose(log_sigma_sq_pred, lv_ref, atol=1e-5), "log_var mismatch"

    print("KERNEL_OK")
</pallas_src>

<mosaic_0001>
module attributes {stable_mosaic.version = 11 : i64} {
  func.func @_fused_head_kernel(%arg0: i32, %arg1: memref<128x32xf32, #tpu.memory_space<vmem>>, %arg2: memref<8x32xf32, #tpu.memory_space<vmem>>, %arg3: memref<8x1xf32, #tpu.memory_space<vmem>>, %arg4: memref<8x128xf32, #tpu.memory_space<vmem>>) attributes {dimension_semantics = [#tpu.dimension_semantics<parallel>], iteration_bounds = array<i64: 1>, scalar_prefetch = 0 : i64, scratch_operands = 0 : i64, tpu.core_type = #tpu.core_type<tc>, window_params = [{transform_indices = @transform_0, window_bounds = array<i64: 128, 32>}, {pipeline_mode = #tpu.pipeline_mode<synchronous>, transform_indices = @transform_1, window_bounds = array<i64: 8, 32>}, {pipeline_mode = #tpu.pipeline_mode<synchronous>, transform_indices = @transform_2, window_bounds = array<i64: 8, 1>}, {transform_indices = @transform_3, window_bounds = array<i64: 8, 128>}]} {
    %c0 = arith.constant 0 : index
    %c0_0 = arith.constant 0 : index
    %0 = vector.load %arg2[%c0, %c0_0] : memref<8x32xf32, #tpu.memory_space<vmem>>, vector<8x32xf32>
    %c0_1 = arith.constant 0 : index
    %c0_2 = arith.constant 0 : index
    %1 = vector.load %arg1[%c0_1, %c0_2] : memref<128x32xf32, #tpu.memory_space<vmem>>, vector<128x32xf32>
    %cst = arith.constant dense<0.000000e+00> : vector<8x128xf32>
    %2 = tpu.matmul %0, %1, %cst {dimension_numbers = #tpu.dot_dimension_numbers<[1], [1], [0], [0], [0, 0, 1, 0], [], []>} : vector<8x32xf32>, vector<128x32xf32>, vector<8x128xf32> -> vector<8x128xf32>
    %c0_3 = arith.constant 0 : index
    %c0_4 = arith.constant 0 : index
    %3 = vector.load %arg3[%c0_3, %c0_4] : memref<8x1xf32, #tpu.memory_space<vmem>>, vector<8x1xf32>
    %4 = vector.broadcast %3 : vector<8x1xf32> to vector<8x128xf32>
    %5 = arith.addf %2, %4 : vector<8x128xf32>
    %c0_5 = arith.constant 0 : index
    %c0_6 = arith.constant 0 : index
    %6 = vector.load %arg4[%c0_5, %c0_6] : memref<8x128xf32, #tpu.memory_space<vmem>>, vector<8x128xf32>
    tpu.vector_store %arg4[%c0_5, %c0_6], %5 {strides = array<i32>} : memref<8x128xf32, #tpu.memory_space<vmem>>, vector<8x128xf32>,
    return
  }
  func.func @transform_0(%arg0: i32) -> (i32, i32) {
    %c0_i32 = arith.constant 0 : i32
    %c0_i32_0 = arith.constant 0 : i32
    return %arg0, %c0_i32 : i32, i32
  }
  func.func @transform_1(%arg0: i32) -> (i32, i32) {
    %c0_i32 = arith.constant 0 : i32
    %c0_i32_0 = arith.constant 0 : i32
    %c0_i32_1 = arith.constant 0 : i32
    return %c0_i32, %c0_i32_0 : i32, i32
  }
  func.func @transform_2(%arg0: i32) -> (i32, i32) {
    %c0_i32 = arith.constant 0 : i32
    %c0_i32_0 = arith.constant 0 : i32
    %c0_i32_1 = arith.constant 0 : i32
    return %c0_i32, %c0_i32_0 : i32, i32
  }
  func.func @transform_3(%arg0: i32) -> (i32, i32) {
    %c0_i32 = arith.constant 0 : i32
    %c0_i32_0 = arith.constant 0 : i32
    return %c0_i32, %arg0 : i32, i32
  }
}

</mosaic_0001>

<llo_original>
// kernel: uncertainty_head_apply.1
$region0: #{uncertainty_head_apply.1}
  #allocation0 [shape = 'u32[]', space=smem, size = 0x4, offset = 0x4, fixed_abs, tag = 'smem constant byte address 0x4 - core index']
  #allocation1 [shape = 'u32[144,128]{1,0:T(1,128)}', space=vmem, size = 0x12000, scoped, tag = 'internal scratch']
  %s0 = inlined_call_operand.vmem [shape: f32[128,32], index: 0, kind: input, shape index: {}]
  %s1 = inlined_call_operand.vmem [shape: f32[8,32], index: 1, kind: input, shape index: {}]
  %s2 = inlined_call_operand.vmem [shape: f32[8,1], index: 2, kind: input, shape index: {}]
  %s3 = inlined_call_operand.vmem [shape: f32[8,128], index: 3, kind: output, shape index: {}]
  %s4 = sld [smem:[#allocation0]]
  $region22: #{uncertainty_head_apply.1} parent=0
    _
  %s6 = ssub.s32 1, %s4
  %s7 = scalar_select 0, %s6, %s4
  // Predicated region
  $region2: #{uncertainty_head_apply.1} parent=0 // pred_check
    _
  $region3: #{uncertainty_head_apply.1} parent=0 // pred_check_branch
    %9 = sbr.rel (0) target = $region5
  $region4: #{uncertainty_head_apply.1} parent=0 // pred_region
    _
  $region5: #{uncertainty_head_apply.1} parent=0 // pred_fallthru
    _
  // Predicated region
  $region6: #{uncertainty_head_apply.1} parent=0 // pred_check
    _
  $region7: #{uncertainty_head_apply.1} parent=0 // pred_check_branch
    %11 = sbr.rel (0) target = $region9
  $region8: #{uncertainty_head_apply.1} parent=0 // pred_region
    _
  $region9: #{uncertainty_head_apply.1} parent=0 // pred_fallthru
    _
  // Predicated region
  $region10: #{uncertainty_head_apply.1} parent=0 // pred_check
    _
  $region11: #{uncertainty_head_apply.1} parent=0 // pred_check_branch
    %13 = sbr.rel (0) target = $region13
  $region12: #{uncertainty_head_apply.1} parent=0 // pred_region
    _
  $region13: #{uncertainty_head_apply.1} parent=0 // pred_fallthru
    _
  %v14 = vld [vmem:[%s1] sm:$0xff]
  %v15 = vld [vmem:[%s0] sm:$0xff]
  %v16 = vld [vmem:[%s0 + $0x8] sm:$0xff]
  %v17 = vld [vmem:[%s0 + $0x10] sm:$0xff]
  %v18 = vld [vmem:[%s0 + $0x18] sm:$0xff]
  %v19 = vld [vmem:[%s0 + $0x20] sm:$0xff]
  %v20 = vld [vmem:[%s0 + $0x28] sm:$0xff]
  %v21 = vld [vmem:[%s0 + $0x30] sm:$0xff]
  %v22 = vld [vmem:[%s0 + $0x38] sm:$0xff]
  %v23 = vld [vmem:[%s0 + $0x40] sm:$0xff]
  %v24 = vld [vmem:[%s0 + $0x48] sm:$0xff]
  %v25 = vld [vmem:[%s0 + $0x50] sm:$0xff]
  %v26 = vld [vmem:[%s0 + $0x58] sm:$0xff]
  %v27 = vld [vmem:[%s0 + $0x60] sm:$0xff]
  %v28 = vld [vmem:[%s0 + $0x68] sm:$0xff]
  %v29 = vld [vmem:[%s0 + $0x70] sm:$0xff]
  %v30 = vld [vmem:[%s0 + $0x78] sm:$0xff]
  %v31 = vld [vmem:[%s2] sm:$0xff]
  %33 = vset.pattern.permute.xlu0 0
  %34 = vperm.xlu0 %33, %v31
  %v35 = vpop.permute.xlu0 %34
  %vm37 = vcmask 261120
  %v39 = vsel %vm37, %v14, 0
  %v42 = vsel %vm37, %v15, 0
  %v45 = vsel %vm37, %v16, 0
  %v48 = vsel %vm37, %v17, 0
  %v51 = vsel %vm37, %v18, 0
  %v54 = vsel %vm37, %v19, 0
  %v57 = vsel %vm37, %v20, 0
  %v60 = vsel %vm37, %v21, 0
  %v63 = vsel %vm37, %v22, 0
  %v66 = vsel %vm37, %v23, 0
  %v69 = vsel %vm37, %v24, 0
  %v72 = vsel %vm37, %v25, 0
  %v75 = vsel %vm37, %v26, 0
  %v78 = vsel %vm37, %v27, 0
  %v81 = vsel %vm37, %v28, 0
  %v84 = vsel %vm37, %v29, 0
  %v87 = vsel %vm37, %v30, 0
  %89 = vmatprep.subr.mxu0 0.0
  %90 = vmatpush1.xpose.msra.mxu0 %v42
  %91 = vmatprep.subr.mxu0 0.0
  %92 = vmatpush1.xpose.msra.mxu0 %v45
  %93 = vmatprep.subr.mxu0 0.0
  %94 = vmatpush1.xpose.msra.mxu0 %v48
  %95 = vmatprep.subr.mxu0 0.0
  %96 = vmatpush1.xpose.msra.mxu0 %v51
  %97 = vmatprep.subr.mxu0 0.0
  %98 = vmatpush1.xpose.msra.mxu0 %v54
  %99 = vmatprep.subr.mxu0 0.0
  %100 = vmatpush1.xpose.msra.mxu0 %v57
  %101 = vmatprep.subr.mxu0 0.0
  %102 = vmatpush1.xpose.msra.mxu0 %v60
  %103 = vmatprep.subr.mxu0 0.0
  %104 = vmatpush1.xpose.msra.mxu0 %v63
  %105 = vmatprep.subr.mxu0 0.0
  %106 = vmatpush1.xpose.msra.mxu0 %v66
  %107 = vmatprep.subr.mxu0 0.0
  %108 = vmatpush1.xpose.msra.mxu0 %v69
  %109 = vmatprep.subr.mxu0 0.0
  %110 = vmatpush1.xpose.msra.mxu0 %v72
  %111 = vmatprep.subr.mxu0 0.0
  %112 = vmatpush1.xpose.msra.mxu0 %v75
  %113 = vmatprep.subr.mxu0 0.0
  %114 = vmatpush1.xpose.msra.mxu0 %v78
  %115 = vmatprep.subr.mxu0 0.0
  %116 = vmatpush1.xpose.msra.mxu0 %v81
  %117 = vmatprep.subr.mxu0 0.0
  %118 = vmatpush1.xpose.msra.mxu0 %v84
  %119 = vmatprep.subr.mxu0 0.0
  %120 = vmatpush1.xpose.msra.mxu0 %v87
  %121 = vmatprep.subr.mxu0 0.0
  %122 = vmatpush1.xpose.msra.mxu0 0.0
  %123 = vmatprep.subr.mxu0 0.0
  %124 = vmatpush1.xpose.msra.mxu0 0.0
  %125 = vmatprep.subr.mxu0 0.0
  %126 = vmatpush1.xpose.msra.mxu0 0.0
  %127 = vmatprep.subr.mxu0 0.0
  %128 = vmatpush1.xpose.msra.mxu0 0.0
  %129 = vmatprep.subr.mxu0 0.0
  %130 = vmatpush1.xpose.msra.mxu0 0.0
  %131 = vmatprep.subr.mxu0 0.0
  %132 = vmatpush1.xpose.msra.mxu0 0.0
  %133 = vmatprep.subr.mxu0 0.0
  %134 = vmatpush1.xpose.msra.mxu0 0.0
  %135 = vmatprep.subr.mxu0 0.0
  %136 = vmatpush1.xpose.msra.mxu0 0.0
  %137 = vmatprep.subr.mxu0 0.0
  %138 = vmatpush1.xpose.msra.mxu0 0.0
  %139 = vmatprep.subr.mxu0 0.0
  %140 = vmatpush1.xpose.msra.mxu0 0.0
  %141 = vmatprep.subr.mxu0 0.0
  %142 = vmatpush1.xpose.msra.mxu0 0.0
  %143 = vmatprep.subr.mxu0 0.0
  %144 = vmatpush1.xpose.msra.mxu0 0.0
  %145 = vmatprep.subr.mxu0 0.0
  %146 = vmatpush1.xpose.msra.mxu0 0.0
  %147 = vmatprep.subr.mxu0 0.0
  %148 = vmatpush1.xpose.msra.mxu0 0.0
  %149 = vmatprep.subr.mxu0 0.0
  %150 = vmatpush1.xpose.msra.mxu0 0.0
  %151 = vmatprep.subr.mxu0 0.0
  %152 = vmatpush1.xpose.msra.mxu0 0.0
  %153 = vmatprep.mubr.f32.mxu0 0.0
  %154 = vmatmul.mubr.f32.gmra.mrb[0].mxu0 %v39
  %v155 = vpop.f32.mrb[0].mxu0
  %v156 = vadd.f32 %v35, %v155
  %v157 = vpop.f32.mrb[0].mxu0
  %158 = vdwg.mxu0
  %159 = vst [vmem:[%s3] sm:$0xff] %v156
  // Predicated region
  $region14: #{uncertainty_head_apply.1} parent=0 // pred_check
    _
  $region15: #{uncertainty_head_apply.1} parent=0 // pred_check_branch
    %161 = sbr.rel (0) target = $region17
  $region16: #{uncertainty_head_apply.1} parent=0 // pred_region
    _
  $region17: #{uncertainty_head_apply.1} parent=0 // pred_fallthru
    _
  // Predicated region
  $region18: #{uncertainty_head_apply.1} parent=0 // pred_check
    _
  $region19: #{uncertainty_head_apply.1} parent=0 // pred_check_branch
    %163 = sbr.rel (0) target = $region21
  $region20: #{uncertainty_head_apply.1} parent=0 // pred_region
    _
  $region21: #{uncertainty_head_apply.1} parent=0 // pred_fallthru
    _

</llo_original>
